<compile_context>
chip_gen: v7x
topology: tpu7x:2x2x1
jax: 0.10.0
libtpu: 0.0.40
codegen_flags: <defaults>
</compile_context>

<pallas_src>
import functools
import math

import jax
import jax.numpy as jnp
from jax.experimental import pallas as pl
from jax.experimental.pallas import tpu as pltpu


# --------------------------------------------------------------------------
# Token- and feature-tiled projection matmul kernel (fused QKV and wo).
# --------------------------------------------------------------------------
def _matmul_kernel(x_ref, w_ref, o_ref):
    o_ref[...] = jnp.dot(
        x_ref[...], w_ref[...], preferred_element_type=jnp.float32
    ).astype(o_ref.dtype)


def _pick_tile(n, candidates):
    for c in candidates:
        if n % c == 0:
            return c
    return n  # full-extent fallback (legal: full-dim block)


def _matmul(x2d, w_t):
    """x2d: (T, din); w_t: (din, dout) (weights pre-transposed). Returns (T, dout)."""
    T, din = x2d.shape
    dout = w_t.shape[1]
    tm = _pick_tile(T, (512, 256, 128, 64, 32, 16, 8))
    tn = _pick_tile(dout, (512, 256, 128))
    itm = x2d.dtype.itemsize

    flops = 2 * T * din * dout
    bytes_accessed = int((T * din + (T // tm) * din * dout + T * dout) * itm)
    # Double-buffered tile bytes + headroom, clamped so it is valid on v7x.
    vmem = 2 * (tm * din + din * tn + tm * tn) * max(itm, 4) + (4 << 20)
    vmem = int(min(max(vmem, 32 << 20), 64 << 20))

    return pl.pallas_call(
        _matmul_kernel,
        out_shape=jax.ShapeDtypeStruct((T, dout), x2d.dtype),
        grid_spec=pltpu.PrefetchScalarGridSpec(
            num_scalar_prefetch=0,
            grid=(T // tm, dout // tn),
            in_specs=[
                pl.BlockSpec((tm, din), lambda i, j: (i, 0)),
                pl.BlockSpec((din, tn), lambda i, j: (0, j)),
            ],
            out_specs=pl.BlockSpec((tm, tn), lambda i, j: (i, j)),
        ),
        compiler_params=pltpu.CompilerParams(
            dimension_semantics=("parallel", "parallel"),
            vmem_limit_bytes=vmem,
        ),
        cost_estimate=pl.CostEstimate(
            flops=flops, transcendentals=0, bytes_accessed=bytes_accessed
        ),
    )(x2d, w_t)


# --------------------------------------------------------------------------
# Per-batch-row attention kernel (all heads per grid step):
# RoPE (f32, lane shifts) + scores + f32 softmax + PV.
# --------------------------------------------------------------------------
def _rope(x, cos_t, sin_e, sin_o):
    # Interleaved (complex) RoPE without the MXU:
    #   out[2k]   = x[2k]*cos - x[2k+1]*sin
    #   out[2k+1] = x[2k+1]*cos + x[2k]*sin
    # sin_e is -sin on even lanes / 0 on odd; sin_o is +sin on odd / 0 on even,
    # so the wrap-around entries of the rolls are multiplied by exactly zero.
    up = jnp.roll(x, -1, axis=-1)   # up[..., i] = x[..., i+1]
    dn = jnp.roll(x, 1, axis=-1)    # dn[..., i] = x[..., i-1]
    return x * cos_t + up * sin_e + dn * sin_o


def _attention_kernel(q_ref, k_ref, v_ref, cos_ref, sine_ref, sino_ref,
                      xq_ref, out_ref, *, scale):
    dt = q_ref.dtype
    n_heads = q_ref.shape[1]
    cos_t = cos_ref[...]          # (S, hd) f32
    sin_e = sine_ref[...]         # (S, hd) f32, -sin on even lanes
    sin_o = sino_ref[...]         # (S, hd) f32, +sin on odd lanes

    # TODO(synk): for long sequences, add a KV grid axis with online-softmax
    # (flash) accumulation instead of materializing the full (S, S) score tile,
    # and widen output stores to >=128 lanes (pair heads) for v5e.
    for h in range(n_heads):
        qh = _rope(q_ref[:, h, :].astype(jnp.float32), cos_t, sin_e, sin_o)
        kh = _rope(k_ref[:, h, :].astype(jnp.float32), cos_t, sin_e, sin_o)
        qh_io = qh.astype(dt)     # .type_as(xq)
        kh_io = kh.astype(dt)
        xq_ref[h, :, :] = qh_io   # module returns the rotated, transposed xq

        # scores = q k^T / sqrt(head_dim), f32 accumulation on the MXU.
        s = jax.lax.dot_general(
            qh_io, kh_io, (((1,), (1,)), ((), ())),
            preferred_element_type=jnp.float32) * scale

        # f32 softmax over keys (no mask); divide moved to EUP reciprocal.
        m = jnp.max(s, axis=-1, keepdims=True)
        e = jnp.exp(s - m)
        p = (e * pl.reciprocal(jnp.sum(e, axis=-1, keepdims=True),
                               approx=True)).astype(dt)

        o = jnp.dot(p, v_ref[:, h, :], preferred_element_type=jnp.float32)
        out_ref[:, h, :] = o.astype(dt)


def _attention(qkv, cos_t, sin_e, sin_o, *, scale):
    """qkv: (B, S, 3, H, hd) straight from the fused projection (no transposes).
    Returns (xq_rotated (B, H, S, hd), attn_out (B, S, H, hd))."""
    B, S, _, H, hd = qkv.shape
    dt = qkv.dtype
    itm = dt.itemsize

    def qkv_spec(plane):
        # Squeeze the batch dim and the qkv-plane dim; kernel sees (S, H, hd).
        return pl.BlockSpec((None, S, None, H, hd),
                            lambda b, p=plane: (b, 0, p, 0, 0))

    tbl = pl.BlockSpec((S, hd), lambda b: (0, 0))

    flops = 4 * B * H * S * S * hd + 12 * B * S * H * hd
    bytes_accessed = int(5 * B * S * H * hd * itm + 3 * S * hd * 4)
    vmem = (2 * (5 * S * H * hd * itm + 3 * S * hd * 4)
            + 16 * S * (S + hd) * 4 + (4 << 20))
    vmem = int(min(max(vmem, 32 << 20), 64 << 20))

    xq_rot, attn = pl.pallas_call(
        functools.partial(_attention_kernel, scale=scale),
        out_shape=(
            jax.ShapeDtypeStruct((B, H, S, hd), dt),   # xq (rotated, transposed)
            jax.ShapeDtypeStruct((B, S, H, hd), dt),   # attention output (wo layout)
        ),
        grid_spec=pltpu.PrefetchScalarGridSpec(
            num_scalar_prefetch=0,
            grid=(B,),
            in_specs=[qkv_spec(0), qkv_spec(1), qkv_spec(2), tbl, tbl, tbl],
            out_specs=(
                pl.BlockSpec((None, H, S, hd), lambda b: (b, 0, 0, 0)),
                pl.BlockSpec((None, S, H, hd), lambda b: (b, 0, 0, 0)),
            ),
        ),
        compiler_params=pltpu.CompilerParams(
            dimension_semantics=("parallel",),
            vmem_limit_bytes=vmem,
        ),
        cost_estimate=pl.CostEstimate(
            flops=flops, transcendentals=B * H * S * S,
            bytes_accessed=bytes_accessed),
    )(qkv, qkv, qkv, cos_t, sin_e, sin_o)
    return xq_rot, attn


# --------------------------------------------------------------------------
# Wrapper: full BERTAttention.forward
# --------------------------------------------------------------------------
def bert_attention_pallas(x, wqkv_t, wo_t, cos_half, sin_half, n_heads):
    """x: (B, S, dim). wqkv_t: (dim, 3*dim) = [Wq^T | Wk^T | Wv^T]. wo_t: (dim, dim).
    cos_half/sin_half: (S, head_dim//2) real/imag parts of freqs_cis.
    Returns (xq_rotated (B, H, S, hd), wo(attention_output) (B, S, dim))."""
    B, S, dim = x.shape
    hd = dim // n_heads
    T = B * S

    # Fused QKV projection (single wide GEMM), then a *free* reshape into the
    # (B, S, 3, H, hd) layout the attention kernel reads directly.
    qkv = _matmul(x.reshape(T, dim), wqkv_t)            # (T, 3*dim)
    qkv = qkv.reshape(B, S, 3, n_heads, hd)             # metadata-only reshape

    # RoPE tables in the interleaved (S, hd) layout; sign folded into sin.
    cos_t = jnp.repeat(cos_half.astype(jnp.float32), 2, axis=-1)
    sin_rep = jnp.repeat(sin_half.astype(jnp.float32), 2, axis=-1)
    lane = jnp.arange(hd)
    sin_e = jnp.where(lane % 2 == 0, -sin_rep, 0.0)      # -sin on even lanes
    sin_o = jnp.where(lane % 2 == 1, sin_rep, 0.0)       # +sin on odd lanes

    xq_rot, attn = _attention(qkv, cos_t, sin_e, sin_o,
                              scale=1.0 / math.sqrt(hd))

    # Output projection wo: attention output is already (B, S, H, hd), so the
    # (T, dim) view is a free reshape (no HBM transpose pass).
    out = _matmul(attn.reshape(T, dim), wo_t).reshape(B, S, dim)
    return xq_rot, out


# --------------------------------------------------------------------------
# Plain-JAX reference mirroring the PyTorch forward exactly (f32 ground truth).
# --------------------------------------------------------------------------
def _rope_ref(x, cos_half, sin_half):
    xr = x[..., 0::2]
    xi = x[..., 1::2]
    c = cos_half[None, :, None, :]
    s = sin_half[None, :, None, :]
    out = jnp.stack([xr * c - xi * s, xr * s + xi * c], axis=-1)
    return out.reshape(x.shape)


def bert_attention_ref(x, params, cos_half, sin_half, n_heads):
    B, S, dim = x.shape
    hd = dim // n_heads
    hp = jax.lax.Precision.HIGHEST
    xf = x.astype(jnp.float32)
    wq = params["wq_t"].astype(jnp.float32)
    wk = params["wk_t"].astype(jnp.float32)
    wv = params["wv_t"].astype(jnp.float32)
    wo = params["wo_t"].astype(jnp.float32)
    q = jnp.dot(xf, wq, precision=hp).reshape(B, S, n_heads, hd)
    k = jnp.dot(xf, wk, precision=hp).reshape(B, S, n_heads, hd)
    v = jnp.dot(xf, wv, precision=hp).reshape(B, S, n_heads, hd)
    q = _rope_ref(q, cos_half, sin_half)
    k = _rope_ref(k, cos_half, sin_half)
    q = jnp.transpose(q, (0, 2, 1, 3))
    k = jnp.transpose(k, (0, 2, 1, 3))
    v = jnp.transpose(v, (0, 2, 1, 3))
    scores = jnp.einsum("bhqd,bhkd->bhqk", q, k, precision=hp) / math.sqrt(hd)
    probs = jax.nn.softmax(scores, axis=-1)
    out = jnp.einsum("bhqk,bhkd->bhqd", probs, v, precision=hp)
    out = jnp.transpose(out, (0, 2, 1, 3)).reshape(B, S, dim)
    out = jnp.dot(out, wo, precision=hp)
    return q, out


if __name__ == "__main__":
    # Small config consistent with ModelArgs defaults: dim=512, n_heads=8
    # (head_dim=64), batch=2, seq=8.
    dim, n_heads = 512, 8
    batch, seq = 2, 8
    hd = dim // n_heads

    key = jax.random.PRNGKey(0)
    kx, kq, kk, kv, ko = jax.random.split(key, 5)
    wscale = 0.02
    x = jax.random.normal(kx, (batch, seq, dim), jnp.float32)
    params = {
        "wq_t": wscale * jax.random.normal(kq, (dim, dim), jnp.float32),
        "wk_t": wscale * jax.random.normal(kk, (dim, dim), jnp.float32),
        "wv_t": wscale * jax.random.normal(kv, (dim, dim), jnp.float32),
        "wo_t": wscale * jax.random.normal(ko, (dim, dim), jnp.float32),
    }

    # freqs_cis as real cos/sin tables (shape (seq, head_dim // 2)).
    freqs = 1.0 / (10000.0 ** (jnp.arange(0, hd, 2, dtype=jnp.float32) / hd))
    angles = jnp.outer(jnp.arange(seq, dtype=jnp.float32), freqs)
    cos_half, sin_half = jnp.cos(angles), jnp.sin(angles)

    ok = True
    for dtype, tol in ((jnp.float32, 5e-3), (jnp.bfloat16, 3e-2)):
        xd = x.astype(dtype)
        pd = {n: w.astype(dtype) for n, w in params.items()}
        wqkv_t = jnp.concatenate([pd["wq_t"], pd["wk_t"], pd["wv_t"]], axis=1)
        xq, out = bert_attention_pallas(xd, wqkv_t, pd["wo_t"],
                                        cos_half, sin_half, n_heads)
        xq, out = jax.block_until_ready((xq, out))
        xq_ref, out_ref = bert_attention_ref(xd, pd, cos_half, sin_half, n_heads)
        if not (jnp.allclose(xq.astype(jnp.float32), xq_ref, atol=tol, rtol=tol)
                and jnp.allclose(out.astype(jnp.float32), out_ref,
                                 atol=tol, rtol=tol)):
            ok = False

    if ok:
        print("KERNEL_OK")
</pallas_src>

<mosaic_0001>
module attributes {stable_mosaic.version = 11 : i64} {
  func.func @_matmul_kernel(%arg0: i32, %arg1: i32, %arg2: memref<16x512xf32, #tpu.memory_space<vmem>>, %arg3: memref<512x512xf32, #tpu.memory_space<vmem>>, %arg4: memref<16x512xf32, #tpu.memory_space<vmem>>) attributes {dimension_semantics = [#tpu.dimension_semantics<parallel>, #tpu.dimension_semantics<parallel>], iteration_bounds = array<i64: 1, 3>, scalar_prefetch = 0 : i64, scratch_operands = 0 : i64, tpu.core_type = #tpu.core_type<tc>, window_params = [{transform_indices = @transform_0, window_bounds = array<i64: 16, 512>}, {transform_indices = @transform_1, window_bounds = array<i64: 512, 512>}, {transform_indices = @transform_2, window_bounds = array<i64: 16, 512>}]} {
    %c0 = arith.constant 0 : index
    %c0_0 = arith.constant 0 : index
    %0 = vector.load %arg2[%c0, %c0_0] : memref<16x512xf32, #tpu.memory_space<vmem>>, vector<16x512xf32>
    %c0_1 = arith.constant 0 : index
    %c0_2 = arith.constant 0 : index
    %1 = vector.load %arg3[%c0_1, %c0_2] : memref<512x512xf32, #tpu.memory_space<vmem>>, vector<512x512xf32>
    %cst = arith.constant dense<0.000000e+00> : vector<16x512xf32>
    %2 = tpu.matmul %0, %1, %cst {dimension_numbers = #tpu.dot_dimension_numbers<[1], [0], [0], [1], [0, 0, 1, 1], [], []>} : vector<16x512xf32>, vector<512x512xf32>, vector<16x512xf32> -> vector<16x512xf32>
    %c0_3 = arith.constant 0 : index
    %c0_4 = arith.constant 0 : index
    %3 = vector.load %arg4[%c0_3, %c0_4] : memref<16x512xf32, #tpu.memory_space<vmem>>, vector<16x512xf32>
    tpu.vector_store %arg4[%c0_3, %c0_4], %2 {strides = array<i32>} : memref<16x512xf32, #tpu.memory_space<vmem>>, vector<16x512xf32>,
    return
  }
  func.func @transform_0(%arg0: i32, %arg1: i32) -> (i32, i32) {
    %c0_i32 = arith.constant 0 : i32
    %c0_i32_0 = arith.constant 0 : i32
    return %arg0, %c0_i32 : i32, i32
  }
  func.func @transform_1(%arg0: i32, %arg1: i32) -> (i32, i32) {
    %c0_i32 = arith.constant 0 : i32
    %c0_i32_0 = arith.constant 0 : i32
    return %c0_i32, %arg1 : i32, i32
  }
  func.func @transform_2(%arg0: i32, %arg1: i32) -> (i32, i32) {
    %c0_i32 = arith.constant 0 : i32
    return %arg0, %arg1 : i32, i32
  }
}

</mosaic_0001>

<llo_original>
// kernel: tpu_custom_call.1
$region0: #{tpu_custom_call.1}
  #allocation0 [shape = 'u32[]', space=smem, size = 0x4, offset = 0x4, fixed_abs, tag = 'smem constant byte address 0x4 - core index']
  #allocation1 [shape = 'u32[144,128]{1,0:T(1,128)}', space=vmem, size = 0x12000, scoped, tag = 'internal scratch']
  %s0 = inlined_call_operand.hbm [shape: f32[16,512], index: 0, kind: input, shape index: {}]
  %s1 = inlined_call_operand.hbm [shape: f32[512,1536], index: 1, kind: input, shape index: {}]
  %s2 = inlined_call_operand.hbm [shape: f32[16,1536], index: 2, kind: output, shape index: {}]
  %s3 = sld [smem:[#allocation0]]
  $region49: #{tpu_custom_call.1} parent=0
    _
  %s5 = ssub.s32 1, %s3
  %s6 = scalar_select 0, %s5, %s3
  $region1: #{tpu_custom_call.1} parent=0
    #allocation2 [shape = 'u8[32768]{0}', space=vmem, size = 0x8000, scoped, tag = 'input window, operand 0, single buffered']
    #allocation3 [shape = 's32[2]{0}', space=sflag, size = 0x8, scoped, tag = 'scoped memory for tpu_custom_call.1']
    #allocation4 [shape = 's32[2]{0}', space=sflag, size = 0x8, scoped, tag = 'scoped memory for tpu_custom_call.1']
    #allocation5 [shape = 'u8[2097152]{0}', space=vmem, size = 0x200000, scoped, tag = 'input window, operand 1']
    #allocation6 [shape = 's32[2]{0}', space=sflag, size = 0x8, scoped, tag = 'scoped memory for tpu_custom_call.1']
    #allocation7 [shape = 'u8[65536]{0}', space=vmem, size = 0x10000, scoped, tag = 'output window, operand 0']
    %7 = vsyncpa [#allocation3], 0
    %8 = vsyncpa [#allocation6], 0
    %s9 = scalar_lea.sflag [#allocation6], 1
    %10 = vsyncpa %s9, 0
    %11 = vsyncpa [#allocation4], 0
    %s12 = scalar_lea.sflag [#allocation4], 1
    %13 = vsyncpa %s12, 0
    loop: start=0, step=1, limit=5
    $region2: #{tpu_custom_call.1} parent=1 // loop_pre_header
      _
    $region3: #{tpu_custom_call.1} parent=1 // loop_header
      %s15 = sphi 0, %s19
      %p16 = scmp.ge.s32.totalorder %s15, 5
      %s22 = sphi 0, %s34
      %s23 = sphi 0, %s30
      %s24 = sphi 0, %s22
      %s25 = sphi 0, %s23
      %s26 = sphi 0, %s24
      %s27 = sphi 0, %s25
      %s37 = sphi 0, %s39
      %s40 = sphi 0, %s37
      %s41 = sphi 0, %s40
      %s57 = sphi 0, %s41
      %s63 = sphi 0, %s65
      %s66 = sphi 0, %s63
      %s67 = sphi 0, %s66
      %s83 = sphi 0, %s67
      %s91 = sphi 0, %s93
      %s94 = sphi 0, %s91
      %s95 = sphi 0, %s94
      %s111 = sphi 0, %s95
    $region4: #{tpu_custom_call.1} parent=1 // loop_header_branch
      %18 = sbr.rel (%p16) target = $region8
    $region5: #{tpu_custom_call.1} parent=1 // loop_body
      %s20 = ssub.s32 %s15, 1
      %s21 = ssub.s32 %s15, 2
      %s28 = sadd.s32 1, %s23
      %p29 = scmp.ge.s32.totalorder %s28, 3
      %s30 = scalar_select %p29, 0, %s28
      %s31 = sadd.s32 1, %s22
      %s32 = scalar_select %p29, %s31, %s22
      %p33 = scmp.ge.s32.totalorder %s32, 1
      %s34 = scalar_select %p33, 0, %s32
      %s35 = ssub.s32 %s22, %s34
      %p36 = scmp.eq.s32.totalorder %s35, 0
      %s38 = sadd.s32 %s37, 1
      %s39 = scalar_select %p36, %s37, %s38
      %p42 = pneg %p36
      %p43 = scmp.eq.s32.totalorder %s15, 2
      %p44 = por %p42, %p43
      %p45 = scmp.ne.s32.totalorder %s37, %s40
      %p46 = scmp.eq.s32.totalorder %s15, 0
      %p47 = por %p45, %p46
      %p48 = scmp.ne.s32.totalorder %s37, %s40
      %p49 = scmp.eq.s32.totalorder %s20, 2
      %p50 = por %p48, %p49
      %p51 = scmp.ne.s32.totalorder %s40, %s41
      %p52 = scmp.eq.s32.totalorder %s20, 0
      %p53 = por %p51, %p52
      %p54 = scmp.ne.s32.totalorder %s40, %s41
      %p55 = scmp.eq.s32.totalorder %s21, 2
      %p56 = por %p54, %p55
      %p58 = scmp.ne.s32.totalorder %s41, %s57
      %p59 = scmp.eq.s32.totalorder %s21, 0
      %p60 = por %p58, %p59
      %s61 = ssub.s32 %s23, %s30
      %p62 = scmp.eq.s32.totalorder %s61, 0
      %s64 = sadd.s32 %s63, 1
      %s65 = scalar_select %p62, %s63, %s64
      %p68 = pneg %p62
      %p69 = scmp.eq.s32.totalorder %s15, 2
      %p70 = por %p68, %p69
      %p71 = scmp.ne.s32.totalorder %s63, %s66
      %p72 = scmp.eq.s32.totalorder %s15, 0
      %p73 = por %p71, %p72
      %p74 = scmp.ne.s32.totalorder %s63, %s66
      %p75 = scmp.eq.s32.totalorder %s20, 2
      %p76 = por %p74, %p75
      %p77 = scmp.ne.s32.totalorder %s66, %s67
      %p78 = scmp.eq.s32.totalorder %s20, 0
      %p79 = por %p77, %p78
      %p80 = scmp.ne.s32.totalorder %s66, %s67
      %p81 = scmp.eq.s32.totalorder %s21, 2
      %p82 = por %p80, %p81
      %p84 = scmp.ne.s32.totalorder %s67, %s83
      %p85 = scmp.eq.s32.totalorder %s21, 0
      %p86 = por %p84, %p85
      %s87 = ssub.s32 %s22, %s34
      %s88 = ssub.s32 %s23, %s30
      %s89 = sor.u32 %s87, %s88
      %p90 = scmp.eq.s32.totalorder %s89, 0
      %s92 = sadd.s32 %s91, 1
      %s93 = scalar_select %p90, %s91, %s92
      %p96 = pneg %p90
      %p97 = scmp.eq.s32.totalorder %s15, 2
      %p98 = por %p96, %p97
      %p99 = scmp.ne.s32.totalorder %s91, %s94
      %p100 = scmp.eq.s32.totalorder %s15, 0
      %p101 = por %p99, %p100
      %p102 = scmp.ne.s32.totalorder %s91, %s94
      %p103 = scmp.eq.s32.totalorder %s20, 2
      %p104 = por %p102, %p103
      %p105 = scmp.ne.s32.totalorder %s94, %s95
      %p106 = scmp.eq.s32.totalorder %s20, 0
      %p107 = por %p105, %p106
      %p108 = scmp.ne.s32.totalorder %s94, %s95
      %p109 = scmp.eq.s32.totalorder %s21, 2
      %p110 = por %p108, %p109
      %p112 = scmp.ne.s32.totalorder %s95, %s111
      %p113 = scmp.eq.s32.totalorder %s21, 0
      %p114 = por %p112, %p113
      %p115 = scmp.le.s32.totalorder 1, %s15
      %p116 = scmp.lt.s32.totalorder %s15, 4
      %p117 = pnand %p115, %p116
      %p118 = pneg %p117
      // Predicated region
      $region9: #{tpu_custom_call.1} parent=5 // pred_check
        _
      $region10: #{tpu_custom_call.1} parent=5 // pred_check_branch
        %120 = sbr.rel (%p117) target = $region12
      $region11: #{tpu_custom_call.1} parent=5 // pred_region
        %s121 = ssub.s32 %s15, 1
        // Predicated region
        $region13: #{tpu_custom_call.1} parent=11 // pred_check
          %p122 = pneg %p53
        $region14: #{tpu_custom_call.1} parent=11 // pred_check_branch
          %124 = sbr.rel (%p122) target = $region16
        $region15: #{tpu_custom_call.1} parent=11 // pred_region
          %s125 = smul.u32 2, %s24
          %s127 = ssub.s32 1024, 1024
          %128 = vsyncadd [#allocation3], %s127
          %s129 = smul.addr %s125, 4
          %s130 = smul.addr %s129, 128
          %s131 = scalar_lea.hbm %s0, %s130
          %s132 = sshll.u32 [#allocation2], 4
          %s133 = int_to_ptr.vmem [resolvable:$true] %s132
          %138 = dma.hbm_to_vmem [thread:$0]  %s131, 1024, %s133, [#allocation3], 512, 512, 32
        $region16: #{tpu_custom_call.1} parent=11 // pred_fallthru
          _
      $region12: #{tpu_custom_call.1} parent=5 // pred_fallthru
        _
      %p139 = scmp.lt.s32.totalorder %s15, 3
      // Predicated region
      $region17: #{tpu_custom_call.1} parent=5 // pred_check
        %p140 = pneg %p139
      $region18: #{tpu_custom_call.1} parent=5 // pred_check_branch
        %142 = sbr.rel (%p140) target = $region20
      $region19: #{tpu_custom_call.1} parent=5 // pred_region
        // Predicated region
        $region21: #{tpu_custom_call.1} parent=19 // pred_check
          %p143 = pneg %p73
        $region22: #{tpu_custom_call.1} parent=19 // pred_check_branch
          %145 = sbr.rel (%p143) target = $region24
        $region23: #{tpu_custom_call.1} parent=19 // pred_region
          %s146 = sand.u32 %s63, 1
          %s147 = scalar_lea.sflag [#allocation6], %s146
          %s148 = sand.u32 %s63, 1
          %s149 = smul.addr %s148, 2048
          %s150 = scalar_lea.vmem [#allocation5], %s149
          %s151 = smul.u32 4, %s23
          %s153 = ssub.s32 32768, 32768
          %154 = vsyncadd %s147, %s153
          %s155 = smul.addr %s151, 128
          %s156 = scalar_lea.hbm %s1, %s155
          %s157 = sshll.u32 %s150, 4
          %s158 = int_to_ptr.vmem [resolvable:$true] %s157
          %163 = dma.hbm_to_vmem [thread:$0]  %s156, 32768, %s158, %s147, 1536, 512, 32
        $region24: #{tpu_custom_call.1} parent=19 // pred_fallthru
          _
      $region20: #{tpu_custom_call.1} parent=5 // pred_fallthru
        _
      %p164 = scmp.le.s32.totalorder 1, %s15
      %p165 = scmp.lt.s32.totalorder %s15, 4
      %p166 = pnand %p164, %p165
      %p167 = pneg %p166
      // Predicated region
      $region25: #{tpu_custom_call.1} parent=5 // pred_check
        _
      $region26: #{tpu_custom_call.1} parent=5 // pred_check_branch
        %169 = sbr.rel (%p166) target = $region28
      $region27: #{tpu_custom_call.1} parent=5 // pred_region
        %s170 = ssub.s32 %s15, 1
        // Predicated region
        $region29: #{tpu_custom_call.1} parent=27 // pred_check
          %p171 = pneg %p53
        $region30: #{tpu_custom_call.1} parent=27 // pred_check_branch
          %173 = sbr.rel (%p171) target = $region32
        $region31: #{tpu_custom_call.1} parent=27 // pred_region
          %174 = dma.done [#allocation3], 1024
        $region32: #{tpu_custom_call.1} parent=27 // pred_fallthru
          _
        %s175 = sand.u32 %s66, 1
        %s176 = scalar_lea.sflag [#allocation6], %s175
        %s177 = sand.u32 %s66, 1
        %s178 = smul.addr %s177, 2048
        %s179 = scalar_lea.vmem [#allocation5], %s178
        // Predicated region
        $region33: #{tpu_custom_call.1} parent=27 // pred_check
          %p180 = pneg %p79
        $region34: #{tpu_custom_call.1} parent=27 // pred_check_branch
          %182 = sbr.rel (%p180) target = $region36
        $region35: #{tpu_custom_call.1} parent=27 // pred_region
          %183 = dma.done %s176, 32768
        $region36: #{tpu_custom_call.1} parent=27 // pred_fallthru
          _
        %p184 = pneg %p53
        %p185 = pneg %p50
        %s186 = sand.u32 %s66, 1
        %s187 = scalar_lea.sflag [#allocation6], %s186
        %s188 = sand.u32 %s66, 1
        %s189 = smul.addr %s188, 2048
        %s190 = scalar_lea.vmem [#allocation5], %s189
        %p191 = pneg %p79
        %p192 = pneg %p76
        %p193 = pneg %p107
        %p194 = pneg %p104
        %s195 = sand.u32 %s94, 1
        %s196 = scalar_lea.sflag [#allocation4], %s195
        %s197 = sand.u32 %s94, 1
        %s198 = smul.addr %s197, 64
        %s199 = scalar_lea.vmem [#allocation7], %s198
        %s200 = smul.u32 2, %s24
        %s201 = smul.u32 4, %s25
        %s202 = smul.u32 2, %s24
        %s203 = smul.u32 4, %s25
        %v204 = vld [vmem:[#allocation2] sm:$0xff]
        %v205 = vld [vmem:[#allocation2 + $0x8] sm:$0xff]
        %v206 = vld [vmem:[#allocation2 + $0x10] sm:$0xff]
        %v207 = vld [vmem:[#allocation2 + $0x18] sm:$0xff]
        %v208 = vld [vmem:[#allocation2 + $0x20] sm:$0xff]
        %v209 = vld [vmem:[#allocation2 + $0x28] sm:$0xff]
        %v210 = vld [vmem:[#allocation2 + $0x30] sm:$0xff]
        %v211 = vld [vmem:[#allocation2 + $0x38] sm:$0xff]
        %v212 = vld [vmem:[%s179] sm:$0xff]
        %v213 = vld [vmem:[%s179 + $0x8] sm:$0xff]
        %v214 = vld [vmem:[%s179 + $0x10] sm:$0xff]
        %v215 = vld [vmem:[%s179 + $0x18] sm:$0xff]
        %v216 = vld [vmem:[%s179 + $0x20] sm:$0xff]
        %v217 = vld [vmem:[%s179 + $0x28] sm:$0xff]
        %v218 = vld [vmem:[%s179 + $0x30] sm:$0xff]
        %v219 = vld [vmem:[%s179 + $0x38] sm:$0xff]
        %v220 = vld [vmem:[%s179 + $0x40] sm:$0xff]
        %v221 = vld [vmem:[%s179 + $0x48] sm:$0xff]
        %v222 = vld [vmem:[%s179 + $0x50] sm:$0xff]
        %v223 = vld [vmem:[%s179 + $0x58] sm:$0xff]
        %v224 = vld [vmem:[%s179 + $0x60] sm:$0xff]
        %v225 = vld [vmem:[%s179 + $0x68] sm:$0xff]
        %v226 = vld [vmem:[%s179 + $0x70] sm:$0xff]
        %v227 = vld [vmem:[%s179 + $0x78] sm:$0xff]
        %v228 = vld [vmem:[%s179 + $0x80] sm:$0xff]
        %v229 = vld [vmem:[%s179 + $0x88] sm:$0xff]
        %v230 = vld [vmem:[%s179 + $0x90] sm:$0xff]
        %v231 = vld [vmem:[%s179 + $0x98] sm:$0xff]
        %v232 = vld [vmem:[%s179 + $0xa0] sm:$0xff]
        %v233 = vld [vmem:[%s179 + $0xa8] sm:$0xff]
        %v234 = vld [vmem:[%s179 + $0xb0] sm:$0xff]
        %v235 = vld [vmem:[%s179 + $0xb8] sm:$0xff]
        %v236 = vld [vmem:[%s179 + $0xc0] sm:$0xff]
        %v237 = vld [vmem:[%s179 + $0xc8] sm:$0xff]
        %v238 = vld [vmem:[%s179 + $0xd0] sm:$0xff]
        %v239 = vld [vmem:[%s179 + $0xd8] sm:$0xff]
        %v240 = vld [vmem:[%s179 + $0xe0] sm:$0xff]
        %v241 = vld [vmem:[%s179 + $0xe8] sm:$0xff]
        %v242 = vld [vmem:[%s179 + $0xf0] sm:$0xff]
        %v243 = vld [vmem:[%s179 + $0xf8] sm:$0xff]
        %v244 = vld [vmem:[%s179 + $0x100] sm:$0xff]
        %v245 = vld [vmem:[%s179 + $0x108] sm:$0xff]
        %v246 = vld [vmem:[%s179 + $0x110] sm:$0xff]
        %v247 = vld [vmem:[%s179 + $0x118] sm:$0xff]
        %v248 = vld [vmem:[%s179 + $0x120] sm:$0xff]
        %v249 = vld [vmem:[%s179 + $0x128] sm:$0xff]
        %v250 = vld [vmem:[%s179 + $0x130] sm:$0xff]
        %v251 = vld [vmem:[%s179 + $0x138] sm:$0xff]
        %v252 = vld [vmem:[%s179 + $0x140] sm:$0xff]
        %v253 = vld [vmem:[%s179 + $0x148] sm:$0xff]
        %v254 = vld [vmem:[%s179 + $0x150] sm:$0xff]
        %v255 = vld [vmem:[%s179 + $0x158] sm:$0xff]
        %v256 = vld [vmem:[%s179 + $0x160] sm:$0xff]
        %v257 = vld [vmem:[%s179 + $0x168] sm:$0xff]
        %v258 = vld [vmem:[%s179 + $0x170] sm:$0xff]
        %v259 = vld [vmem:[%s179 + $0x178] sm:$0xff]
        %v260 = vld [vmem:[%s179 + $0x180] sm:$0xff]
        %v261 = vld [vmem:[%s179 + $0x188] sm:$0xff]
        %v262 = vld [vmem:[%s179 + $0x190] sm:$0xff]
        %v263 = vld [vmem:[%s179 + $0x198] sm:$0xff]
        %v264 = vld [vmem:[%s179 + $0x1a0] sm:$0xff]
        %v265 = vld [vmem:[%s179 + $0x1a8] sm:$0xff]
        %v266 = vld [vmem:[%s179 + $0x1b0] sm:$0xff]
        %v267 = vld [vmem:[%s179 + $0x1b8] sm:$0xff]
        %v268 = vld [vmem:[%s179 + $0x1c0] sm:$0xff]
        %v269 = vld [vmem:[%s179 + $0x1c8] sm:$0xff]
        %v270 = vld [vmem:[%s179 + $0x1d0] sm:$0xff]
        %v271 = vld [vmem:[%s179 + $0x1d8] sm:$0xff]
        %v272 = vld [vmem:[%s179 + $0x1e0] sm:$0xff]
        %v273 = vld [vmem:[%s179 + $0x1e8] sm:$0xff]
        %v274 = vld [vmem:[%s179 + $0x1f0] sm:$0xff]
        %v275 = vld [vmem:[%s179 + $0x1f8] sm:$0xff]
        %v276 = vld [vmem:[%s179 + $0x200] sm:$0xff]
        %v277 = vld [vmem:[%s179 + $0x208] sm:$0xff]
        %v278 = vld [vmem:[%s179 + $0x210] sm:$0xff]
        %v279 = vld [vmem:[%s179 + $0x218] sm:$0xff]
        %v280 = vld [vmem:[%s179 + $0x220] sm:$0xff]
        %v281 = vld [vmem:[%s179 + $0x228] sm:$0xff]
        %v282 = vld [vmem:[%s179 + $0x230] sm:$0xff]
        %v283 = vld [vmem:[%s179 + $0x238] sm:$0xff]
        %v284 = vld [vmem:[%s179 + $0x240] sm:$0xff]
        %v285 = vld [vmem:[%s179 + $0x248] sm:$0xff]
        %v286 = vld [vmem:[%s179 + $0x250] sm:$0xff]
        %v287 = vld [vmem:[%s179 + $0x258] sm:$0xff]
        %v288 = vld [vmem:[%s179 + $0x260] sm:$0xff]
        %v289 = vld [vmem:[%s179 + $0x268] sm:$0xff]
        %v290 = vld [vmem:[%s179 + $0x270] sm:$0xff]
        %v291 = vld [vmem:[%s179 + $0x278] sm:$0xff]
        %v292 = vld [vmem:[%s179 + $0x280] sm:$0xff]
        %v293 = vld [vmem:[%s179 + $0x288] sm:$0xff]
        %v294 = vld [vmem:[%s179 + $0x290] sm:$0xff]
        %v295 = vld [vmem:[%s179 + $0x298] sm:$0xff]
        %v296 = vld [vmem:[%s179 + $0x2a0] sm:$0xff]
        %v297 = vld [vmem:[%s179 + $0x2a8] sm:$0xff]
        %v298 = vld [vmem:[%s179 + $0x2b0] sm:$0xff]
        %v299 = vld [vmem:[%s179 + $0x2b8] sm:$0xff]
        %v300 = vld [vmem:[%s179 + $0x2c0] sm:$0xff]
        %v301 = vld [vmem:[%s179 + $0x2c8] sm:$0xff]
        %v302 = vld [vmem:[%s179 + $0x2d0] sm:$0xff]
        %v303 = vld [vmem:[%s179 + $0x2d8] sm:$0xff]
        %v304 = vld [vmem:[%s179 + $0x2e0] sm:$0xff]
        %v305 = vld [vmem:[%s179 + $0x2e8] sm:$0xff]
        %v306 = vld [vmem:[%s179 + $0x2f0] sm:$0xff]
        %v307 = vld [vmem:[%s179 + $0x2f8] sm:$0xff]
        %v308 = vld [vmem:[%s179 + $0x300] sm:$0xff]
        %v309 = vld [vmem:[%s179 + $0x308] sm:$0xff]
        %v310 = vld [vmem:[%s179 + $0x310] sm:$0xff]
        %v311 = vld [vmem:[%s179 + $0x318] sm:$0xff]
        %v312 = vld [vmem:[%s179 + $0x320] sm:$0xff]
        %v313 = vld [vmem:[%s179 + $0x328] sm:$0xff]
        %v314 = vld [vmem:[%s179 + $0x330] sm:$0xff]
        %v315 = vld [vmem:[%s179 + $0x338] sm:$0xff]
        %v316 = vld [vmem:[%s179 + $0x340] sm:$0xff]
        %v317 = vld [vmem:[%s179 + $0x348] sm:$0xff]
        %v318 = vld [vmem:[%s179 + $0x350] sm:$0xff]
        %v319 = vld [vmem:[%s179 + $0x358] sm:$0xff]
        %v320 = vld [vmem:[%s179 + $0x360] sm:$0xff]
        %v321 = vld [vmem:[%s179 + $0x368] sm:$0xff]
        %v322 = vld [vmem:[%s179 + $0x370] sm:$0xff]
        %v323 = vld [vmem:[%s179 + $0x378] sm:$0xff]
        %v324 = vld [vmem:[%s179 + $0x380] sm:$0xff]
        %v325 = vld [vmem:[%s179 + $0x388] sm:$0xff]
        %v326 = vld [vmem:[%s179 + $0x390] sm:$0xff]
        %v327 = vld [vmem:[%s179 + $0x398] sm:$0xff]
        %v328 = vld [vmem:[%s179 + $0x3a0] sm:$0xff]
        %v329 = vld [vmem:[%s179 + $0x3a8] sm:$0xff]
        %v330 = vld [vmem:[%s179 + $0x3b0] sm:$0xff]
        %v331 = vld [vmem:[%s179 + $0x3b8] sm:$0xff]
        %v332 = vld [vmem:[%s179 + $0x3c0] sm:$0xff]
        %v333 = vld [vmem:[%s179 + $0x3c8] sm:$0xff]
        %v334 = vld [vmem:[%s179 + $0x3d0] sm:$0xff]
        %v335 = vld [vmem:[%s179 + $0x3d8] sm:$0xff]
        %v336 = vld [vmem:[%s179 + $0x3e0] sm:$0xff]
        %v337 = vld [vmem:[%s179 + $0x3e8] sm:$0xff]
        %v338 = vld [vmem:[%s179 + $0x3f0] sm:$0xff]
        %v339 = vld [vmem:[%s179 + $0x3f8] sm:$0xff]
        %v340 = vld [vmem:[%s179 + $0x400] sm:$0xff]
        %v341 = vld [vmem:[%s179 + $0x408] sm:$0xff]
        %v342 = vld [vmem:[%s179 + $0x410] sm:$0xff]
        %v343 = vld [vmem:[%s179 + $0x418] sm:$0xff]
        %v344 = vld [vmem:[%s179 + $0x420] sm:$0xff]
        %v345 = vld [vmem:[%s179 + $0x428] sm:$0xff]
        %v346 = vld [vmem:[%s179 + $0x430] sm:$0xff]
        %v347 = vld [vmem:[%s179 + $0x438] sm:$0xff]
        %v348 = vld [vmem:[%s179 + $0x440] sm:$0xff]
        %v349 = vld [vmem:[%s179 + $0x448] sm:$0xff]
        %v350 = vld [vmem:[%s179 + $0x450] sm:$0xff]
        %v351 = vld [vmem:[%s179 + $0x458] sm:$0xff]
        %v352 = vld [vmem:[%s179 + $0x460] sm:$0xff]
        %v353 = vld [vmem:[%s179 + $0x468] sm:$0xff]
        %v354 = vld [vmem:[%s179 + $0x470] sm:$0xff]
        %v355 = vld [vmem:[%s179 + $0x478] sm:$0xff]
        %v356 = vld [vmem:[%s179 + $0x480] sm:$0xff]
        %v357 = vld [vmem:[%s179 + $0x488] sm:$0xff]
        %v358 = vld [vmem:[%s179 + $0x490] sm:$0xff]
        %v359 = vld [vmem:[%s179 + $0x498] sm:$0xff]
        %v360 = vld [vmem:[%s179 + $0x4a0] sm:$0xff]
        %v361 = vld [vmem:[%s179 + $0x4a8] sm:$0xff]
        %v362 = vld [vmem:[%s179 + $0x4b0] sm:$0xff]
        %v363 = vld [vmem:[%s179 + $0x4b8] sm:$0xff]
        %v364 = vld [vmem:[%s179 + $0x4c0] sm:$0xff]
        %v365 = vld [vmem:[%s179 + $0x4c8] sm:$0xff]
        %v366 = vld [vmem:[%s179 + $0x4d0] sm:$0xff]
        %v367 = vld [vmem:[%s179 + $0x4d8] sm:$0xff]
        %v368 = vld [vmem:[%s179 + $0x4e0] sm:$0xff]
        %v369 = vld [vmem:[%s179 + $0x4e8] sm:$0xff]
        %v370 = vld [vmem:[%s179 + $0x4f0] sm:$0xff]
        %v371 = vld [vmem:[%s179 + $0x4f8] sm:$0xff]
        %v372 = vld [vmem:[%s179 + $0x500] sm:$0xff]
        %v373 = vld [vmem:[%s179 + $0x508] sm:$0xff]
        %v374 = vld [vmem:[%s179 + $0x510] sm:$0xff]
        %v375 = vld [vmem:[%s179 + $0x518] sm:$0xff]
        %v376 = vld [vmem:[%s179 + $0x520] sm:$0xff]
        %v377 = vld [vmem:[%s179 + $0x528] sm:$0xff]
        %v378 = vld [vmem:[%s179 + $0x530] sm:$0xff]
        %v379 = vld [vmem:[%s179 + $0x538] sm:$0xff]
        %v380 = vld [vmem:[%s179 + $0x540] sm:$0xff]
        %v381 = vld [vmem:[%s179 + $0x548] sm:$0xff]
        %v382 = vld [vmem:[%s179 + $0x550] sm:$0xff]
        %v383 = vld [vmem:[%s179 + $0x558] sm:$0xff]
        %v384 = vld [vmem:[%s179 + $0x560] sm:$0xff]
        %v385 = vld [vmem:[%s179 + $0x568] sm:$0xff]
        %v386 = vld [vmem:[%s179 + $0x570] sm:$0xff]
        %v387 = vld [vmem:[%s179 + $0x578] sm:$0xff]
        %v388 = vld [vmem:[%s179 + $0x580] sm:$0xff]
        %v389 = vld [vmem:[%s179 + $0x588] sm:$0xff]
        %v390 = vld [vmem:[%s179 + $0x590] sm:$0xff]
        %v391 = vld [vmem:[%s179 + $0x598] sm:$0xff]
        %v392 = vld [vmem:[%s179 + $0x5a0] sm:$0xff]
        %v393 = vld [vmem:[%s179 + $0x5a8] sm:$0xff]
        %v394 = vld [vmem:[%s179 + $0x5b0] sm:$0xff]
        %v395 = vld [vmem:[%s179 + $0x5b8] sm:$0xff]
        %v396 = vld [vmem:[%s179 + $0x5c0] sm:$0xff]
        %v397 = vld [vmem:[%s179 + $0x5c8] sm:$0xff]
        %v398 = vld [vmem:[%s179 + $0x5d0] sm:$0xff]
        %v399 = vld [vmem:[%s179 + $0x5d8] sm:$0xff]
        %v400 = vld [vmem:[%s179 + $0x5e0] sm:$0xff]
        %v401 = vld [vmem:[%s179 + $0x5e8] sm:$0xff]
        %v402 = vld [vmem:[%s179 + $0x5f0] sm:$0xff]
        %v403 = vld [vmem:[%s179 + $0x5f8] sm:$0xff]
        %v404 = vld [vmem:[%s179 + $0x600] sm:$0xff]
        %v405 = vld [vmem:[%s179 + $0x608] sm:$0xff]
        %v406 = vld [vmem:[%s179 + $0x610] sm:$0xff]
        %v407 = vld [vmem:[%s179 + $0x618] sm:$0xff]
        %v408 = vld [vmem:[%s179 + $0x620] sm:$0xff]
        %v409 = vld [vmem:[%s179 + $0x628] sm:$0xff]
        %v410 = vld [vmem:[%s179 + $0x630] sm:$0xff]
        %v411 = vld [vmem:[%s179 + $0x638] sm:$0xff]
        %v412 = vld [vmem:[%s179 + $0x640] sm:$0xff]
        %v413 = vld [vmem:[%s179 + $0x648] sm:$0xff]
        %v414 = vld [vmem:[%s179 + $0x650] sm:$0xff]
        %v415 = vld [vmem:[%s179 + $0x658] sm:$0xff]
        %v416 = vld [vmem:[%s179 + $0x660] sm:$0xff]
        %v417 = vld [vmem:[%s179 + $0x668] sm:$0xff]
        %v418 = vld [vmem:[%s179 + $0x670] sm:$0xff]
        %v419 = vld [vmem:[%s179 + $0x678] sm:$0xff]
        %v420 = vld [vmem:[%s179 + $0x680] sm:$0xff]
        %v421 = vld [vmem:[%s179 + $0x688] sm:$0xff]
        %v422 = vld [vmem:[%s179 + $0x690] sm:$0xff]
        %v423 = vld [vmem:[%s179 + $0x698] sm:$0xff]
        %v424 = vld [vmem:[%s179 + $0x6a0] sm:$0xff]
        %v425 = vld [vmem:[%s179 + $0x6a8] sm:$0xff]
        %v426 = vld [vmem:[%s179 + $0x6b0] sm:$0xff]
        %v427 = vld [vmem:[%s179 + $0x6b8] sm:$0xff]
        %v428 = vld [vmem:[%s179 + $0x6c0] sm:$0xff]
        %v429 = vld [vmem:[%s179 + $0x6c8] sm:$0xff]
        %v430 = vld [vmem:[%s179 + $0x6d0] sm:$0xff]
        %v431 = vld [vmem:[%s179 + $0x6d8] sm:$0xff]
        %v432 = vld [vmem:[%s179 + $0x6e0] sm:$0xff]
        %v433 = vld [vmem:[%s179 + $0x6e8] sm:$0xff]
        %v434 = vld [vmem:[%s179 + $0x6f0] sm:$0xff]
        %v435 = vld [vmem:[%s179 + $0x6f8] sm:$0xff]
        %v436 = vld [vmem:[%s179 + $0x700] sm:$0xff]
        %v437 = vld [vmem:[%s179 + $0x708] sm:$0xff]
        %v438 = vld [vmem:[%s179 + $0x710] sm:$0xff]
        %v439 = vld [vmem:[%s179 + $0x718] sm:$0xff]
        %v440 = vld [vmem:[%s179 + $0x720] sm:$0xff]
        %v441 = vld [vmem:[%s179 + $0x728] sm:$0xff]
        %v442 = vld [vmem:[%s179 + $0x730] sm:$0xff]
        %v443 = vld [vmem:[%s179 + $0x738] sm:$0xff]
        %v444 = vld [vmem:[%s179 + $0x740] sm:$0xff]
        %v445 = vld [vmem:[%s179 + $0x748] sm:$0xff]
        %v446 = vld [vmem:[%s179 + $0x750] sm:$0xff]
        %v447 = vld [vmem:[%s179 + $0x758] sm:$0xff]
        %v448 = vld [vmem:[%s179 + $0x760] sm:$0xff]
        %v449 = vld [vmem:[%s179 + $0x768] sm:$0xff]
        %v450 = vld [vmem:[%s179 + $0x770] sm:$0xff]
        %v451 = vld [vmem:[%s179 + $0x778] sm:$0xff]
        %v452 = vld [vmem:[%s179 + $0x780] sm:$0xff]
        %v453 = vld [vmem:[%s179 + $0x788] sm:$0xff]
        %v454 = vld [vmem:[%s179 + $0x790] sm:$0xff]
        %v455 = vld [vmem:[%s179 + $0x798] sm:$0xff]
        %v456 = vld [vmem:[%s179 + $0x7a0] sm:$0xff]
        %v457 = vld [vmem:[%s179 + $0x7a8] sm:$0xff]
        %v458 = vld [vmem:[%s179 + $0x7b0] sm:$0xff]
        %v459 = vld [vmem:[%s179 + $0x7b8] sm:$0xff]
        %v460 = vld [vmem:[%s179 + $0x7c0] sm:$0xff]
        %v461 = vld [vmem:[%s179 + $0x7c8] sm:$0xff]
        %v462 = vld [vmem:[%s179 + $0x7d0] sm:$0xff]
        %v463 = vld [vmem:[%s179 + $0x7d8] sm:$0xff]
        %v464 = vld [vmem:[%s179 + $0x7e0] sm:$0xff]
        %v465 = vld [vmem:[%s179 + $0x7e8] sm:$0xff]
        %v466 = vld [vmem:[%s179 + $0x7f0] sm:$0xff]
        %v467 = vld [vmem:[%s179 + $0x7f8] sm:$0xff]
        %468 = vmatprep.subr.mxu0 %v213
        %469 = vmatpush1.msra.mxu0 %v212
        %470 = vmatprep.subr.mxu0 %v217
        %471 = vmatpush1.msra.mxu0 %v216
        %472 = vmatprep.subr.mxu0 %v221
        %473 = vmatpush1.msra.mxu0 %v220
        %474 = vmatprep.subr.mxu0 %v225
        %475 = vmatpush1.msra.mxu0 %v224
        %476 = vmatprep.subr.mxu0 %v229
        %477 = vmatpush1.msra.mxu0 %v228
        %478 = vmatprep.subr.mxu0 %v233
        %479 = vmatpush1.msra.mxu0 %v232
        %480 = vmatprep.subr.mxu0 %v237
        %481 = vmatpush1.msra.mxu0 %v236
        %482 = vmatprep.subr.mxu0 %v241
        %483 = vmatpush1.msra.mxu0 %v240
        %484 = vmatprep.subr.mxu0 %v245
        %485 = vmatpush1.msra.mxu0 %v244
        %486 = vmatprep.subr.mxu0 %v249
        %487 = vmatpush1.msra.mxu0 %v248
        %488 = vmatprep.subr.mxu0 %v253
        %489 = vmatpush1.msra.mxu0 %v252
        %490 = vmatprep.subr.mxu0 %v257
        %491 = vmatpush1.msra.mxu0 %v256
        %492 = vmatprep.subr.mxu0 %v261
        %493 = vmatpush1.msra.mxu0 %v260
        %494 = vmatprep.subr.mxu0 %v265
        %495 = vmatpush1.msra.mxu0 %v264
        %496 = vmatprep.subr.mxu0 %v269
        %497 = vmatpush1.msra.mxu0 %v268
        %498 = vmatprep.subr.mxu0 %v273
        %499 = vmatpush1.msra.mxu0 %v272
        %500 = vmatprep.subr.mxu0 %v277
        %501 = vmatpush1.msra.mxu0 %v276
        %502 = vmatprep.subr.mxu0 %v281
        %503 = vmatpush1.msra.mxu0 %v280
        %504 = vmatprep.subr.mxu0 %v285
        %505 = vmatpush1.msra.mxu0 %v284
        %506 = vmatprep.subr.mxu0 %v289
        %507 = vmatpush1.msra.mxu0 %v288
        %508 = vmatprep.subr.mxu0 %v293
        %509 = vmatpush1.msra.mxu0 %v292
        %510 = vmatprep.subr.mxu0 %v297
        %511 = vmatpush1.msra.mxu0 %v296
        %512 = vmatprep.subr.mxu0 %v301
        %513 = vmatpush1.msra.mxu0 %v300
        %514 = vmatprep.subr.mxu0 %v305
        %515 = vmatpush1.msra.mxu0 %v304
        %516 = vmatprep.subr.mxu0 %v309
        %517 = vmatpush1.msra.mxu0 %v308
        %518 = vmatprep.subr.mxu0 %v313
        %519 = vmatpush1.msra.mxu0 %v312
        %520 = vmatprep.subr.mxu0 %v317
        %521 = vmatpush1.msra.mxu0 %v316
        %522 = vmatprep.subr.mxu0 %v321
        %523 = vmatpush1.msra.mxu0 %v320
        %524 = vmatprep.subr.mxu0 %v325
        %525 = vmatpush1.msra.mxu0 %v324
        %526 = vmatprep.subr.mxu0 %v329
        %527 = vmatpush1.msra.mxu0 %v328
        %528 = vmatprep.subr.mxu0 %v333
        %529 = vmatpush1.msra.mxu0 %v332
        %530 = vmatprep.subr.mxu0 %v337
        %531 = vmatpush1.msra.mxu0 %v336
        %532 = vmatprep.mubr.f32.mxu0 %v205
        %533 = vmatmul.mubr.f32.gmra.mrb[0].mxu0 %v204
        %v534 = vpop.f32.mrb[0].mxu0
        %v535 = vadd.f32 0.0, %v534
        %v536 = vpop.f32.mrb[0].mxu0
        %v537 = vadd.f32 0.0, %v536
        %538 = vmatprep.mubr.f32.mxu0 %v209
        %539 = vmatmul.mubr.f32.gmra.mrb[0].mxu0 %v208
        %v540 = vpop.f32.mrb[0].mxu0
        %v541 = vadd.f32 0.0, %v540
        %v542 = vpop.f32.mrb[0].mxu0
        %v543 = vadd.f32 0.0, %v542
        %544 = vdwg.mxu0
        %545 = vmatprep.subr.mxu0 %v341
        %546 = vmatpush1.msra.mxu0 %v340
        %547 = vmatprep.subr.mxu0 %v345
        %548 = vmatpush1.msra.mxu0 %v344
        %549 = vmatprep.subr.mxu0 %v349
        %550 = vmatpush1.msra.mxu0 %v348
        %551 = vmatprep.subr.mxu0 %v353
        %552 = vmatpush1.msra.mxu0 %v352
        %553 = vmatprep.subr.mxu0 %v357
        %554 = vmatpush1.msra.mxu0 %v356
        %555 = vmatprep.subr.mxu0 %v361
        %556 = vmatpush1.msra.mxu0 %v360
        %557 = vmatprep.subr.mxu0 %v365
        %558 = vmatpush1.msra.mxu0 %v364
        %559 = vmatprep.subr.mxu0 %v369
        %560 = vmatpush1.msra.mxu0 %v368
        %561 = vmatprep.subr.mxu0 %v373
        %562 = vmatpush1.msra.mxu0 %v372
        %563 = vmatprep.subr.mxu0 %v377
        %564 = vmatpush1.msra.mxu0 %v376
        %565 = vmatprep.subr.mxu0 %v381
        %566 = vmatpush1.msra.mxu0 %v380
        %567 = vmatprep.subr.mxu0 %v385
        %568 = vmatpush1.msra.mxu0 %v384
        %569 = vmatprep.subr.mxu0 %v389
        %570 = vmatpush1.msra.mxu0 %v388
        %571 = vmatprep.subr.mxu0 %v393
        %572 = vmatpush1.msra.mxu0 %v392
        %573 = vmatprep.subr.mxu0 %v397
        %574 = vmatpush1.msra.mxu0 %v396
        %575 = vmatprep.subr.mxu0 %v401
        %576 = vmatpush1.msra.mxu0 %v400
        %577 = vmatprep.subr.mxu0 %v405
        %578 = vmatpush1.msra.mxu0 %v404
        %579 = vmatprep.subr.mxu0 %v409
        %580 = vmatpush1.msra.mxu0 %v408
        %581 = vmatprep.subr.mxu0 %v413
        %582 = vmatpush1.msra.mxu0 %v412
        %583 = vmatprep.subr.mxu0 %v417
        %584 = vmatpush1.msra.mxu0 %v416
        %585 = vmatprep.subr.mxu0 %v421
        %586 = vmatpush1.msra.mxu0 %v420
        %587 = vmatprep.subr.mxu0 %v425
        %588 = vmatpush1.msra.mxu0 %v424
        %589 = vmatprep.subr.mxu0 %v429
        %590 = vmatpush1.msra.mxu0 %v428
        %591 = vmatprep.subr.mxu0 %v433
        %592 = vmatpush1.msra.mxu0 %v432
        %593 = vmatprep.subr.mxu0 %v437
        %594 = vmatpush1.msra.mxu0 %v436
        %595 = vmatprep.subr.mxu0 %v441
        %596 = vmatpush1.msra.mxu0 %v440
        %597 = vmatprep.subr.mxu0 %v445
        %598 = vmatpush1.msra.mxu0 %v444
        %599 = vmatprep.subr.mxu0 %v449
        %600 = vmatpush1.msra.mxu0 %v448
        %601 = vmatprep.subr.mxu0 %v453
        %602 = vmatpush1.msra.mxu0 %v452
        %603 = vmatprep.subr.mxu0 %v457
        %604 = vmatpush1.msra.mxu0 %v456
        %605 = vmatprep.subr.mxu0 %v461
        %606 = vmatpush1.msra.mxu0 %v460
        %607 = vmatprep.subr.mxu0 %v465
        %608 = vmatpush1.msra.mxu0 %v464
        %609 = vmatprep.mubr.f32.mxu0 %v207
        %610 = vmatmul.mubr.f32.gmra.mrb[0].mxu0 %v206
        %v611 = vpop.f32.mrb[0].mxu0
        %v612 = vadd.f32 %v535, %v611
        %v613 = vpop.f32.mrb[0].mxu0
        %v614 = vadd.f32 %v537, %v613
        %615 = vmatprep.mubr.f32.mxu0 %v211
        %616 = vmatmul.mubr.f32.gmra.mrb[0].mxu0 %v210
        %v617 = vpop.f32.mrb[0].mxu0
        %v618 = vadd.f32 %v541, %v617
        %v619 = vpop.f32.mrb[0].mxu0
        %v620 = vadd.f32 %v543, %v619
        %621 = vdwg.mxu0
        %622 = vmatprep.subr.mxu0 %v215
        %623 = vmatpush1.msra.mxu0 %v214
        %624 = vmatprep.subr.mxu0 %v219
        %625 = vmatpush1.msra.mxu0 %v218
        %626 = vmatprep.subr.mxu0 %v223
        %627 = vmatpush1.msra.mxu0 %v222
        %628 = vmatprep.subr.mxu0 %v227
        %629 = vmatpush1.msra.mxu0 %v226
        %630 = vmatprep.subr.mxu0 %v231
        %631 = vmatpush1.msra.mxu0 %v230
        %632 = vmatprep.subr.mxu0 %v235
        %633 = vmatpush1.msra.mxu0 %v234
        %634 = vmatprep.subr.mxu0 %v239
        %635 = vmatpush1.msra.mxu0 %v238
        %636 = vmatprep.subr.mxu0 %v243
        %637 = vmatpush1.msra.mxu0 %v242
        %638 = vmatprep.subr.mxu0 %v247
        %639 = vmatpush1.msra.mxu0 %v246
        %640 = vmatprep.subr.mxu0 %v251
        %641 = vmatpush1.msra.mxu0 %v250
        %642 = vmatprep.subr.mxu0 %v255
        %643 = vmatpush1.msra.mxu0 %v254
        %644 = vmatprep.subr.mxu0 %v259
        %645 = vmatpush1.msra.mxu0 %v258
        %646 = vmatprep.subr.mxu0 %v263
        %647 = vmatpush1.msra.mxu0 %v262
        %648 = vmatprep.subr.mxu0 %v267
        %649 = vmatpush1.msra.mxu0 %v266
        %650 = vmatprep.subr.mxu0 %v271
        %651 = vmatpush1.msra.mxu0 %v270
        %652 = vmatprep.subr.mxu0 %v275
        %653 = vmatpush1.msra.mxu0 %v274
        %654 = vmatprep.subr.mxu0 %v279
        %655 = vmatpush1.msra.mxu0 %v278
        %656 = vmatprep.subr.mxu0 %v283
        %657 = vmatpush1.msra.mxu0 %v282
        %658 = vmatprep.subr.mxu0 %v287
        %659 = vmatpush1.msra.mxu0 %v286
        %660 = vmatprep.subr.mxu0 %v291
        %661 = vmatpush1.msra.mxu0 %v290
        %662 = vmatprep.subr.mxu0 %v295
        %663 = vmatpush1.msra.mxu0 %v294
        %664 = vmatprep.subr.mxu0 %v299
        %665 = vmatpush1.msra.mxu0 %v298
        %666 = vmatprep.subr.mxu0 %v303
        %667 = vmatpush1.msra.mxu0 %v302
        %668 = vmatprep.subr.mxu0 %v307
        %669 = vmatpush1.msra.mxu0 %v306
        %670 = vmatprep.subr.mxu0 %v311
        %671 = vmatpush1.msra.mxu0 %v310
        %672 = vmatprep.subr.mxu0 %v315
        %673 = vmatpush1.msra.mxu0 %v314
        %674 = vmatprep.subr.mxu0 %v319
        %675 = vmatpush1.msra.mxu0 %v318
        %676 = vmatprep.subr.mxu0 %v323
        %677 = vmatpush1.msra.mxu0 %v322
        %678 = vmatprep.subr.mxu0 %v327
        %679 = vmatpush1.msra.mxu0 %v326
        %680 = vmatprep.subr.mxu0 %v331
        %681 = vmatpush1.msra.mxu0 %v330
        %682 = vmatprep.subr.mxu0 %v335
        %683 = vmatpush1.msra.mxu0 %v334
        %684 = vmatprep.subr.mxu0 %v339
        %685 = vmatpush1.msra.mxu0 %v338
        %686 = vmatprep.mubr.f32.mxu0 %v205
        %687 = vmatmul.mubr.f32.gmra.mrb[0].mxu0 %v204
        %v688 = vpop.f32.mrb[0].mxu0
        %v689 = vadd.f32 0.0, %v688
        %v690 = vpop.f32.mrb[0].mxu0
        %v691 = vadd.f32 0.0, %v690
        %692 = vmatprep.mubr.f32.mxu0 %v209
        %693 = vmatmul.mubr.f32.gmra.mrb[0].mxu0 %v208
        %v694 = vpop.f32.mrb[0].mxu0
        %v695 = vadd.f32 0.0, %v694
        %v696 = vpop.f32.mrb[0].mxu0
        %v697 = vadd.f32 0.0, %v696
        %698 = vdwg.mxu0
        %699 = vmatprep.subr.mxu0 %v343
        %700 = vmatpush1.msra.mxu0 %v342
        %701 = vmatprep.subr.mxu0 %v347
        %702 = vmatpush1.msra.mxu0 %v346
        %703 = vmatprep.subr.mxu0 %v351
        %704 = vmatpush1.msra.mxu0 %v350
        %705 = vmatprep.subr.mxu0 %v355
        %706 = vmatpush1.msra.mxu0 %v354
        %707 = vmatprep.subr.mxu0 %v359
        %708 = vmatpush1.msra.mxu0 %v358
        %709 = vmatprep.subr.mxu0 %v363
        %710 = vmatpush1.msra.mxu0 %v362
        %711 = vmatprep.subr.mxu0 %v367
        %712 = vmatpush1.msra.mxu0 %v366
        %713 = vmatprep.subr.mxu0 %v371
        %714 = vmatpush1.msra.mxu0 %v370
        %715 = vmatprep.subr.mxu0 %v375
        %716 = vmatpush1.msra.mxu0 %v374
        %717 = vmatprep.subr.mxu0 %v379
        %718 = vmatpush1.msra.mxu0 %v378
        %719 = vmatprep.subr.mxu0 %v383
        %720 = vmatpush1.msra.mxu0 %v382
        %721 = vmatprep.subr.mxu0 %v387
        %722 = vmatpush1.msra.mxu0 %v386
        %723 = vmatprep.subr.mxu0 %v391
        %724 = vmatpush1.msra.mxu0 %v390
        %725 = vmatprep.subr.mxu0 %v395
        %726 = vmatpush1.msra.mxu0 %v394
        %727 = vmatprep.subr.mxu0 %v399
        %728 = vmatpush1.msra.mxu0 %v398
        %729 = vmatprep.subr.mxu0 %v403
        %730 = vmatpush1.msra.mxu0 %v402
        %731 = vmatprep.subr.mxu0 %v407
        %732 = vmatpush1.msra.mxu0 %v406
        %733 = vmatprep.subr.mxu0 %v411
        %734 = vmatpush1.msra.mxu0 %v410
        %735 = vmatprep.subr.mxu0 %v415
        %736 = vmatpush1.msra.mxu0 %v414
        %737 = vmatprep.subr.mxu0 %v419
        %738 = vmatpush1.msra.mxu0 %v418
        %739 = vmatprep.subr.mxu0 %v423
        %740 = vmatpush1.msra.mxu0 %v422
        %741 = vmatprep.subr.mxu0 %v427
        %742 = vmatpush1.msra.mxu0 %v426
        %743 = vmatprep.subr.mxu0 %v431
        %744 = vmatpush1.msra.mxu0 %v430
        %745 = vmatprep.subr.mxu0 %v435
        %746 = vmatpush1.msra.mxu0 %v434
        %747 = vmatprep.subr.mxu0 %v439
        %748 = vmatpush1.msra.mxu0 %v438
        %749 = vmatprep.subr.mxu0 %v443
        %750 = vmatpush1.msra.mxu0 %v442
        %751 = vmatprep.subr.mxu0 %v447
        %752 = vmatpush1.msra.mxu0 %v446
        %753 = vmatprep.subr.mxu0 %v451
        %754 = vmatpush1.msra.mxu0 %v450
        %755 = vmatprep.subr.mxu0 %v455
        %756 = vmatpush1.msra.mxu0 %v454
        %757 = vmatprep.subr.mxu0 %v459
        %758 = vmatpush1.msra.mxu0 %v458
        %759 = vmatprep.subr.mxu0 %v463
        %760 = vmatpush1.msra.mxu0 %v462
        %761 = vmatprep.subr.mxu0 %v467
        %762 = vmatpush1.msra.mxu0 %v466
        %763 = vmatprep.mubr.f32.mxu0 %v207
        %764 = vmatmul.mubr.f32.gmra.mrb[0].mxu0 %v206
        %v765 = vpop.f32.mrb[0].mxu0
        %v766 = vadd.f32 %v689, %v765
        %v767 = vpop.f32.mrb[0].mxu0
        %v768 = vadd.f32 %v691, %v767
        %769 = vmatprep.mubr.f32.mxu0 %v211
        %770 = vmatmul.mubr.f32.gmra.mrb[0].mxu0 %v210
        %v771 = vpop.f32.mrb[0].mxu0
        %v772 = vadd.f32 %v695, %v771
        %v773 = vpop.f32.mrb[0].mxu0
        %v774 = vadd.f32 %v697, %v773
        %775 = vdwg.mxu0
        %776 = vst [vmem:[%s199] sm:$0xff] %v612
        %777 = vst [vmem:[%s199 + $0x8] sm:$0xff] %v614
        %778 = vst [vmem:[%s199 + $0x10] sm:$0xff] %v766
        %779 = vst [vmem:[%s199 + $0x18] sm:$0xff] %v768
        %780 = vst [vmem:[%s199 + $0x20] sm:$0xff] %v618
        %781 = vst [vmem:[%s199 + $0x28] sm:$0xff] %v620
        %782 = vst [vmem:[%s199 + $0x30] sm:$0xff] %v772
        %783 = vst [vmem:[%s199 + $0x38] sm:$0xff] %v774
        %s784 = sand.u32 %s94, 1
        %s785 = scalar_lea.sflag [#allocation4], %s784
        %s786 = sand.u32 %s94, 1
        %s787 = smul.addr %s786, 64
        %s788 = scalar_lea.vmem [#allocation7], %s787
        // Predicated region
        $region37: #{tpu_custom_call.1} parent=27 // pred_check
          %p789 = pneg %p104
        $region38: #{tpu_custom_call.1} parent=27 // pred_check_branch
          %791 = sbr.rel (%p789) target = $region40
        $region39: #{tpu_custom_call.1} parent=27 // pred_region
          %s792 = smul.u32 2, %s24
          %s793 = smul.u32 4, %s25
          %s795 = ssub.s32 1024, 1024
          %796 = vsyncadd %s785, %s795
          %s797 = smul.addr %s792, 12
          %s798 = sadd.s32 %s793, %s797
          %s799 = smul.addr %s798, 128
          %s800 = scalar_lea.hbm %s2, %s799
          %s801 = sshll.u32 %s788, 4
          %s802 = int_to_ptr.vmem [resolvable:$true] %s801
          %807 = dma.vmem_to_hbm [thread:$0]  %s802, 1024, %s800, %s785, 512, 1536, 32
        $region40: #{tpu_custom_call.1} parent=27 // pred_fallthru
          _
      $region28: #{tpu_custom_call.1} parent=5 // pred_fallthru
        _
      %p808 = scmp.le.s32.totalorder 2, %s15
      // Predicated region
      $region41: #{tpu_custom_call.1} parent=5 // pred_check
        %p809 = pneg %p808
      $region42: #{tpu_custom_call.1} parent=5 // pred_check_branch
        %811 = sbr.rel (%p809) target = $region44
      $region43: #{tpu_custom_call.1} parent=5 // pred_region
        %s812 = ssub.s32 %s15, 2
        // Predicated region
        $region45: #{tpu_custom_call.1} parent=43 // pred_check
          %p813 = pneg %p110
        $region46: #{tpu_custom_call.1} parent=43 // pred_check_branch
          %815 = sbr.rel (%p813) target = $region48
        $region47: #{tpu_custom_call.1} parent=43 // pred_region
          %s816 = sand.u32 %s95, 1
          %s817 = scalar_lea.sflag [#allocation4], %s816
          %s818 = sand.u32 %s95, 1
          %s819 = smul.addr %s818, 64
          %s820 = scalar_lea.vmem [#allocation7], %s819
          %821 = dma.done %s817, 1024
        $region48: #{tpu_custom_call.1} parent=43 // pred_fallthru
          _
      $region44: #{tpu_custom_call.1} parent=5 // pred_fallthru
        _
    $region6: #{tpu_custom_call.1} parent=1 // loop_footer
      %s19 = sadd.s32 1, %s15
    $region7: #{tpu_custom_call.1} parent=1 // loop_footer_branch
      %14 = sbr.rel target = $region3
    $region8: #{tpu_custom_call.1} parent=1 // loop_exit
      _
    %822 = vsyncpa [#allocation3], 1
    %s823 = scalar_lea.sflag [#allocation3], 1
    %824 = vsyncpa %s823, 1
    %825 = vsyncpa [#allocation6], 1
    %s826 = scalar_lea.sflag [#allocation6], 1
    %827 = vsyncpa %s826, 1
    %828 = vsyncpa [#allocation4], 1
    %s829 = scalar_lea.sflag [#allocation4], 1
    %830 = vsyncpa %s829, 1

</llo_original>
